<compile_context>
chip_gen: v7x
topology: tpu7x:2x2x1
jax: 0.10.0
libtpu: 0.0.40
codegen_flags: <defaults>
</compile_context>

<pallas_src>
import jax
import jax.numpy as jnp
from jax.experimental import pallas as pl
from jax.experimental.pallas import tpu as pltpu


def _round_up(x, m):
    return ((x + m - 1) // m) * m


def _gather_rows_kernel(ids_ref, b_ref, w_hbm, out_ref, gbuf, sem):
    """One grid step gathers TN rows of the fused weight from HBM.

    ids_ref : SMEM int32 [Np]      flattened (padded, clamped) token ids (scalar prefetch)
    b_ref   : VMEM f32  [1, Dmp]   fc bias (grid-invariant)
    w_hbm   : HBM  f32  [V, Dmp]   fused weight E @ Wf (never VMEM-resident)
    out_ref : VMEM      [TN, Dmp]  output tile
    gbuf    : VMEM f32  [TN, Dmp]  gather landing buffer
    sem     : DMA semaphore shared by all row copies of this step
    """
    i = pl.program_id(0)
    tn = out_ref.shape[0]
    base = pl.multiple_of(i * tn, tn)

    # Issue all row DMAs first, then wait for all of them.  All copies share
    # one DMA semaphore and have identical sizes; the final wait can only
    # return once every copy has signalled, so gbuf is fully populated below.
    @pl.loop(0, tn)
    def _issue(r):
        tok = ids_ref[base + r]
        pltpu.make_async_copy(w_hbm.at[tok], gbuf.at[r], sem).start()

    @pl.loop(0, tn)
    def _drain(r):
        tok = ids_ref[base + r]
        pltpu.make_async_copy(w_hbm.at[tok], gbuf.at[r], sem).wait()

    out_ref[...] = (gbuf[...] + b_ref[...]).astype(out_ref.dtype)
    # TODO(synk): nn.Dropout is identity in eval mode; training-mode dropout
    # (pltpu.prng_seed / prng_random_bits) is not implemented here.


def precompute_fused_weight(emb_table, fc_w_t, fc_b):
    """One-off (model-init time) fusion of the frozen embedding with the fc layer.

    Returns (w_fused [V, Dmp] f32, bias [1, Dmp] f32) with D_MODEL zero-padded
    to a multiple of 128 (lane-dense rows / stores).  Row v of w_fused + bias
    equals Linear(E[v]) exactly (f32, HIGHEST-precision contraction).
    """
    V, De = emb_table.shape
    De2, Dm = fc_w_t.shape
    assert De == De2
    Dmp = _round_up(Dm, 128)
    w_fused = jnp.dot(emb_table.astype(jnp.float32), fc_w_t.astype(jnp.float32),
                      precision=jax.lax.Precision.HIGHEST)          # [V, Dm] f32
    w_fused = jnp.pad(w_fused, ((0, 0), (0, Dmp - Dm)))              # [V, Dmp]
    bias = jnp.pad(fc_b.astype(jnp.float32), (0, Dmp - Dm)).reshape(1, Dmp)
    return w_fused, bias


def usual_embedding_forward(tokens, w_fused, bias, *, d_model,
                            padding_idx=0, tile_n=256, out_dtype=jnp.float32):
    """tokens [B,L] int32 -> (features [B,L,D_MODEL], (pad_mask, seq_mask))."""
    B, L = tokens.shape
    V, Dmp = w_fused.shape
    assert bias.shape == (1, Dmp)

    # Flatten B*L, clamp ids to valid rows (no OOB DMA possible), pad to tile.
    N = B * L
    tn = min(_round_up(tile_n, 8), _round_up(N, 8))
    Np = _round_up(N, tn)
    ids = jnp.clip(tokens.reshape(N).astype(jnp.int32), 0, V - 1)
    ids = jnp.pad(ids, (0, Np - N))                                  # pad rows -> row 0
    grid = (Np // tn,)

    out_bytes = jnp.dtype(out_dtype).itemsize
    # VMEM: double-buffered output tile + single gather buffer + bias. The
    # fused weight stays in HBM, so the budget is tiny on every chip.
    vmem_needed = 2 * tn * Dmp * out_bytes + tn * Dmp * 4 + 2 * Dmp * 4
    vmem_limit = int(min(max(2 * vmem_needed, 16 << 20), 64 << 20))

    out_pad = pl.pallas_call(
        _gather_rows_kernel,
        out_shape=jax.ShapeDtypeStruct((Np, Dmp), out_dtype),
        grid_spec=pltpu.PrefetchScalarGridSpec(
            num_scalar_prefetch=1,                                   # ids -> SMEM
            grid=grid,
            in_specs=[
                pl.BlockSpec((1, Dmp), lambda i, ids: (0, 0)),       # bias (grid-invariant)
                pl.BlockSpec(memory_space=pl.ANY),                   # fused weight stays in HBM
            ],
            out_specs=pl.BlockSpec((tn, Dmp), lambda i, ids: (i, 0)),
            scratch_shapes=[
                pltpu.VMEM((tn, Dmp), jnp.float32),                  # gather landing buffer
                pltpu.SemaphoreType.DMA(()),                         # shared row-DMA semaphore
            ],
        ),
        compiler_params=pltpu.CompilerParams(
            dimension_semantics=("parallel",),   # independent row tiles -> both v7x TCs get work
            vmem_limit_bytes=vmem_limit,
        ),
        cost_estimate=pl.CostEstimate(
            flops=Np * Dmp,                                          # bias add only
            transcendentals=0,
            bytes_accessed=Np * 4 + Np * Dmp * 4 + Np * Dmp * out_bytes + Dmp * 4,
        ),
    )(ids, bias, w_fused)

    features = out_pad[:N, :d_model].reshape(B, L, d_model)

    # Masks are trivial compare/iota ops -> plain JAX (matches
    # generate_padding_mask / generate_sequential_mask).
    padding_mask = (tokens == padding_idx)[:, None, None, :]             # (B,1,1,L) bool
    sequential_mask = jnp.triu(jnp.ones((L, L), dtype=jnp.bool_), k=1)   # (L,L) bool, True = masked

    return features, (padding_mask, sequential_mask)


def _reference(tokens, emb_table, fc_w_t, fc_b, padding_idx):
    feats = emb_table[tokens]                                            # [B, L, De]
    out = jnp.einsum("bld,dm->blm", feats, fc_w_t,
                     precision=jax.lax.Precision.HIGHEST) + fc_b         # [B, L, Dm]
    pad_mask = (tokens == padding_idx)[:, None, None, :]
    seq_mask = jnp.triu(jnp.ones((tokens.shape[1], tokens.shape[1]), jnp.bool_), k=1)
    return out, pad_mask, seq_mask


if __name__ == "__main__":
    # Small shapes consistent with the module.
    B, L = 2, 8                 # batch, sequence length
    V = 128                     # vocab size
    D_EMBEDDING = 32
    D_MODEL = 32
    PAD = 0                     # vocab.padding_idx

    key = jax.random.PRNGKey(0)
    k_ids, k_emb, k_w, k_b = jax.random.split(key, 4)

    tokens = jax.random.randint(k_ids, (B, L), 1, V, dtype=jnp.int32)
    tokens = tokens.at[:, -2:].set(PAD)          # some real padding positions

    emb_table = jax.random.normal(k_emb, (V, D_EMBEDDING), dtype=jnp.float32)
    # torch nn.Linear weight is [out, in]; store its transpose [in, out].
    fc_w_t = jax.random.normal(k_w, (D_EMBEDDING, D_MODEL), dtype=jnp.float32) * 0.1
    fc_b = jax.random.normal(k_b, (D_MODEL,), dtype=jnp.float32) * 0.1

    # One-off fusion at "model init" time (hoisted out of the forward pass).
    w_fused, bias = precompute_fused_weight(emb_table, fc_w_t, fc_b)

    feats, (pad_mask, seq_mask) = usual_embedding_forward(
        tokens, w_fused, bias, d_model=D_MODEL, padding_idx=PAD, tile_n=256)
    feats = jax.block_until_ready(feats)

    ref_feats, ref_pad, ref_seq = _reference(tokens, emb_table, fc_w_t, fc_b, PAD)

    assert feats.shape == (B, L, D_MODEL)
    max_err = float(jnp.max(jnp.abs(feats - ref_feats)))
    # f32 gather of a HIGHEST-precision fused weight -> near bit-exact.
    assert jnp.allclose(feats, ref_feats, atol=1e-4, rtol=1e-4), max_err
    assert bool(jnp.all(pad_mask == ref_pad))
    assert bool(jnp.all(seq_mask == ref_seq))

    print("KERNEL_OK")
</pallas_src>

<mosaic_0001>
module attributes {stable_mosaic.version = 11 : i64} {
  func.func @_gather_rows_kernel(%arg0: i32, %arg1: memref<16xi32, #tpu.memory_space<smem>>, %arg2: memref<1x128xf32, #tpu.memory_space<vmem>>, %arg3: memref<128x128xf32, #tpu.memory_space<any>>, %arg4: memref<16x128xf32, #tpu.memory_space<vmem>>, %arg5: memref<16x128xf32, #tpu.memory_space<vmem>>, %arg6: memref<!tpu.dma_semaphore, #tpu.memory_space<semaphore_mem>>) attributes {dimension_semantics = [#tpu.dimension_semantics<parallel>], iteration_bounds = array<i64: 1>, scalar_prefetch = 1 : i64, scratch_operands = 2 : i64, tpu.core_type = #tpu.core_type<tc>, window_params = [{pipeline_mode = #tpu.pipeline_mode<synchronous>, transform_indices = @transform_0, window_bounds = array<i64: 1, 128>}, {}, {transform_indices = @transform_2, window_bounds = array<i64: 16, 128>}]} {
    %c16_i32 = arith.constant 16 : i32
    %0 = arith.muli %arg0, %c16_i32 : i32
    %1 = tpu.assume_multiple %0, 16 : i32
    %c0_i32 = arith.constant 0 : i32
    %c16_i32_0 = arith.constant 16 : i32
    %2 = arith.addi %c0_i32, %c16_i32_0 : i32
    %c1_i32 = arith.constant 1 : i32
    scf.for %arg7 = %c0_i32 to %2 step %c1_i32  : i32 {
      %c1_i32_11 = arith.constant 1 : i32
      %9 = arith.muli %arg7, %c1_i32_11 : i32
      %c0_i32_12 = arith.constant 0 : i32
      %10 = arith.addi %c0_i32_12, %9 : i32
      %11 = arith.addi %1, %10 : i32
      %12 = arith.index_cast %11 : i32 to index
      %13 = memref.load %arg1[%12] : memref<16xi32, #tpu.memory_space<smem>>
      %c0_i32_13 = arith.constant 0 : i32
      %14 = tpu.memref_slice %arg3[%13, %c0_i32_13] : memref<128x128xf32, #tpu.memory_space<any>> -> memref<1x128xf32, #tpu.memory_space<any>>
      %15 = tpu.memref_squeeze %14 : memref<1x128xf32, #tpu.memory_space<any>> -> memref<128xf32, #tpu.memory_space<any>>
      %c0_i32_14 = arith.constant 0 : i32
      %16 = tpu.memref_slice %arg5[%10, %c0_i32_14] : memref<16x128xf32, #tpu.memory_space<vmem>> -> memref<1x128xf32, #tpu.memory_space<vmem>>
      %17 = tpu.memref_squeeze %16 : memref<1x128xf32, #tpu.memory_space<vmem>> -> memref<128xf32, #tpu.memory_space<vmem>>
      tpu.enqueue_dma source(%15 : memref<128xf32, #tpu.memory_space<any>>) target(%17 : memref<128xf32, #tpu.memory_space<vmem>>) target_semaphore(%arg6 : memref<!tpu.dma_semaphore, #tpu.memory_space<semaphore_mem>>)
    }
    %c16_i32_1 = arith.constant 16 : i32
    %c0_i32_2 = arith.constant 0 : i32
    %c16_i32_3 = arith.constant 16 : i32
    %3 = arith.addi %c0_i32_2, %c16_i32_3 : i32
    %c1_i32_4 = arith.constant 1 : i32
    scf.for %arg7 = %c0_i32_2 to %3 step %c1_i32_4  : i32 {
      %c1_i32_11 = arith.constant 1 : i32
      %9 = arith.muli %arg7, %c1_i32_11 : i32
      %c0_i32_12 = arith.constant 0 : i32
      %10 = arith.addi %c0_i32_12, %9 : i32
      %11 = arith.addi %1, %10 : i32
      %12 = arith.index_cast %11 : i32 to index
      %13 = memref.load %arg1[%12] : memref<16xi32, #tpu.memory_space<smem>>
      %c0_i32_13 = arith.constant 0 : i32
      %14 = tpu.memref_slice %arg3[%13, %c0_i32_13] : memref<128x128xf32, #tpu.memory_space<any>> -> memref<1x128xf32, #tpu.memory_space<any>>
      %15 = tpu.memref_squeeze %14 : memref<1x128xf32, #tpu.memory_space<any>> -> memref<128xf32, #tpu.memory_space<any>>
      %c0_i32_14 = arith.constant 0 : i32
      %16 = tpu.memref_slice %arg5[%10, %c0_i32_14] : memref<16x128xf32, #tpu.memory_space<vmem>> -> memref<1x128xf32, #tpu.memory_space<vmem>>
      %17 = tpu.memref_squeeze %16 : memref<1x128xf32, #tpu.memory_space<vmem>> -> memref<128xf32, #tpu.memory_space<vmem>>
      tpu.wait_dma2 semaphore(%arg6 : memref<!tpu.dma_semaphore, #tpu.memory_space<semaphore_mem>>) src(%15 : memref<128xf32, #tpu.memory_space<any>>) dst(%17 : memref<128xf32, #tpu.memory_space<vmem>>)
    }
    %c16_i32_5 = arith.constant 16 : i32
    %c0 = arith.constant 0 : index
    %c0_6 = arith.constant 0 : index
    %4 = vector.load %arg5[%c0, %c0_6] : memref<16x128xf32, #tpu.memory_space<vmem>>, vector<16x128xf32>
    %c0_7 = arith.constant 0 : index
    %c0_8 = arith.constant 0 : index
    %5 = vector.load %arg2[%c0_7, %c0_8] : memref<1x128xf32, #tpu.memory_space<vmem>>, vector<1x128xf32>
    %6 = vector.broadcast %5 : vector<1x128xf32> to vector<16x128xf32>
    %7 = arith.addf %4, %6 : vector<16x128xf32>
    %c0_9 = arith.constant 0 : index
    %c0_10 = arith.constant 0 : index
    %8 = vector.load %arg4[%c0_9, %c0_10] : memref<16x128xf32, #tpu.memory_space<vmem>>, vector<16x128xf32>
    tpu.vector_store %arg4[%c0_9, %c0_10], %7 {strides = array<i32>} : memref<16x128xf32, #tpu.memory_space<vmem>>, vector<16x128xf32>,
    return
  }
  func.func @transform_0(%arg0: i32, %arg1: memref<16xi32, #tpu.memory_space<smem>>) -> (i32, i32) {
    %c0_i32 = arith.constant 0 : i32
    %c0_i32_0 = arith.constant 0 : i32
    %c0_i32_1 = arith.constant 0 : i32
    return %c0_i32, %c0_i32_0 : i32, i32
  }
  func.func @transform_2(%arg0: i32, %arg1: memref<16xi32, #tpu.memory_space<smem>>) -> (i32, i32) {
    %c0_i32 = arith.constant 0 : i32
    %c0_i32_0 = arith.constant 0 : i32
    return %arg0, %c0_i32 : i32, i32
  }
}

</mosaic_0001>

<llo_original>
// kernel: tpu_custom_call.1
$region0: #{tpu_custom_call.1}
  #allocation0 [shape = 'u32[]', space=smem, size = 0x4, offset = 0x4, fixed_abs, tag = 'smem constant byte address 0x4 - core index']
  #allocation1 [shape = 'u32[144,128]{1,0:T(1,128)}', space=vmem, size = 0x12000, scoped, tag = 'internal scratch']
  #allocation2 [shape = 'f32[16,128]{1,0:T(8,128)}', space=vmem, size = 0x2000, scoped, tag = 'scratch operand']
  #allocation3 [shape = 's32[1]{0}', space=sflag, size = 0x4, scoped, tag = 'scratch operand']
  #allocation4 [shape = 's32[1]{0}', space=sflag, size = 0x4, scoped, tag = 'scoped memory for tpu_custom_call.1']
  #allocation5 [shape = 'u8[512]{0}', space=smem, size = 0x200, scoped, tag = 'prefetched SMEM operand 0']
  #allocation8 [shape = 's32[]', space=sflag, size = 0x4, offset = 0, fixed_abs, tag = 'sflag constant byte address 0x0 - dummy sync flag']
  #allocation9 [shape = 's32[]', space=sflag, size = 0x4, offset = 0, fixed_abs, tag = 'sflag constant byte address 0x0 - dummy sync flag']
  #allocation10 [shape = 'u32[]', space=smem, size = 0x4, offset = 0x44, fixed_abs, tag = 'smem constant byte address 0x44 - assertion arg 0']
  #allocation11 [shape = 'u32[]', space=smem, size = 0x4, offset = 0x48, fixed_abs, tag = 'smem constant byte address 0x48 - assertion arg 1']
  %s0 = inlined_call_operand.hbm [shape: s32[16], index: 0, kind: input, shape index: {}]
  %s1 = inlined_call_operand.vmem [shape: f32[1,128], index: 1, kind: input, shape index: {}]
  %s2 = inlined_call_operand.hbm [shape: f32[128,128], index: 2, kind: input, shape index: {}]
  %s3 = inlined_call_operand.hbm [shape: f32[16,128], index: 3, kind: output, shape index: {}]
  %s4 = sld [smem:[#allocation0]]
  $region32: #{tpu_custom_call.1} parent=0
    _
  %s6 = ssub.s32 1, %s4
  %s7 = scalar_select 0, %s6, %s4
  %9 = dma.hbm_to_smem %s0, 16, [#allocation5], [#allocation4]
  %10 = dma.done [#allocation4], 16
  %11 = sfence
  $region1: #{tpu_custom_call.1} parent=0
    #allocation6 [shape = 'u8[8192]{0}', space=vmem, size = 0x2000, scoped, tag = 'output window, operand 0, single buffered']
    #allocation7 [shape = 's32[1]{0}', space=sflag, size = 0x4, scoped, tag = 'scoped memory for tpu_custom_call.1']
    %12 = vsyncpa [#allocation7], 0
    // Predicated region
    $region2: #{tpu_custom_call.1} parent=1 // pred_check
      _
    $region3: #{tpu_custom_call.1} parent=1 // pred_check_branch
      %14 = sbr.rel (0) target = $region5
    $region4: #{tpu_custom_call.1} parent=1 // pred_region
      _
    $region5: #{tpu_custom_call.1} parent=1 // pred_fallthru
      _
    %s15 = smul.u32 0, 16
    loop: start=0, step=1, limit=16
    $region6: #{tpu_custom_call.1} parent=1 // loop_pre_header
      _
    $region7: #{tpu_custom_call.1} parent=1 // loop_header
      %s17 = sphi 0, %s21
      %p18 = scmp.ge.s32.totalorder %s17, 16
    $region8: #{tpu_custom_call.1} parent=1 // loop_header_branch
      %20 = sbr.rel (%p18) target = $region12
    $region9: #{tpu_custom_call.1} parent=1 // loop_body
      %s22 = sadd.s32 %s15, %s17
      %s23 = sld [smem:[#allocation5 + %s22]]
      %s24 = smul.addr %s23, 16
      %s25 = scalar_lea.hbm %s2, %s24
      %s26 = scalar_lea.vmem [#allocation2], %s17
      // Predicated region
      $region13: #{tpu_custom_call.1} parent=9 // pred_check
        _
      $region14: #{tpu_custom_call.1} parent=9 // pred_check_branch
        %28 = sbr.rel target = $region16
      $region15: #{tpu_custom_call.1} parent=9 // pred_region
        %29 = sst [smem:[#allocation10]] [#allocation9]
        %30 = sst [smem:[#allocation11]] [#allocation8]
      $region16: #{tpu_custom_call.1} parent=9 // pred_fallthru
        _
      %32 = shalt.err (0)
      %s34 = sshll.u32 %s26, 4
      %s35 = int_to_ptr.vmem [resolvable:$true] %s34
      %37 = dma.hbm_to_vmem [thread:$0]  %s25, 16, %s35, [#allocation3]
    $region10: #{tpu_custom_call.1} parent=1 // loop_footer
      %s21 = sadd.s32 1, %s17
    $region11: #{tpu_custom_call.1} parent=1 // loop_footer_branch
      %16 = sbr.rel target = $region7
    $region12: #{tpu_custom_call.1} parent=1 // loop_exit
      _
    loop: start=0, step=1, limit=16
    $region17: #{tpu_custom_call.1} parent=1 // loop_pre_header
      _
    $region18: #{tpu_custom_call.1} parent=1 // loop_header
      %s39 = sphi 0, %s43
      %p40 = scmp.ge.s32.totalorder %s39, 16
    $region19: #{tpu_custom_call.1} parent=1 // loop_header_branch
      %42 = sbr.rel (%p40) target = $region23
    $region20: #{tpu_custom_call.1} parent=1 // loop_body
      %s44 = sadd.s32 %s15, %s39
      %s45 = sld [smem:[#allocation5 + %s44]]
      %47 = dma.done [#allocation3], 16
    $region21: #{tpu_custom_call.1} parent=1 // loop_footer
      %s43 = sadd.s32 1, %s39
    $region22: #{tpu_custom_call.1} parent=1 // loop_footer_branch
      %38 = sbr.rel target = $region18
    $region23: #{tpu_custom_call.1} parent=1 // loop_exit
      _
    %v48 = vld [vmem:[#allocation2] sm:$0xff]
    %v49 = vld [vmem:[#allocation2 + $0x8] sm:$0xff]
    %v50 = vld [vmem:[%s1] sm:$0x1]
    %v52 = vlaneseq
    %v53 = vshrl.u32 %v52, 7
    %v54 = vsub.s32 0, %v53
    %v55 = vrot.slane %v50, %v54
    %v57 = vadd.f32 %v48, %v55
    %v58 = vadd.f32 %v49, %v55
    %59 = vst [vmem:[#allocation6] sm:$0xff] %v57
    %60 = vst [vmem:[#allocation6 + $0x8] sm:$0xff] %v58
    // Predicated region
    $region24: #{tpu_custom_call.1} parent=1 // pred_check
      _
    $region25: #{tpu_custom_call.1} parent=1 // pred_check_branch
      %62 = sbr.rel (0) target = $region27
    $region26: #{tpu_custom_call.1} parent=1 // pred_region
      %s64 = ssub.s32 256, 256
      %65 = vsyncadd [#allocation7], %s64
      %s66 = sshll.u32 [#allocation6], 4
      %s67 = int_to_ptr.vmem [resolvable:$true] %s66
      %72 = dma.vmem_to_hbm [thread:$0]  %s67, 256, %s3, [#allocation7], 128, 128, 8
    $region27: #{tpu_custom_call.1} parent=1 // pred_fallthru
      _
    // Predicated region
    $region28: #{tpu_custom_call.1} parent=1 // pred_check
      _
    $region29: #{tpu_custom_call.1} parent=1 // pred_check_branch
      %74 = sbr.rel (0) target = $region31
    $region30: #{tpu_custom_call.1} parent=1 // pred_region
      %75 = dma.done [#allocation7], 256
    $region31: #{tpu_custom_call.1} parent=1 // pred_fallthru
      _
    %76 = vsyncpa [#allocation7], 1
  %77 = vsyncmov [#allocation3]
  %s78 = vpop.sfrf %77
  %p79 = scmp.eq.s32.totalorder %s78, 0
  %p80 = pneg %p79
  %82 = shalt.err (%p80)

</llo_original>
